<compile_context>
chip_gen: v7x
topology: tpu7x:2x2x1
jax: 0.10.0
libtpu: 0.0.40
codegen_flags: <defaults>
</compile_context>

<pallas_src>
import math

import jax
import jax.numpy as jnp
from jax.experimental import pallas as pl
from jax.experimental.pallas import tpu as pltpu


_SUPPORTED_ACTIVATIONS = ("relu", "leaky_relu", "selu", "none")
_LANE_CANDIDATES = (2048, 1024, 512, 256, 128)  # lane-dense last dims (multiples of 128)
_MIN_PALLAS_ELEMENTS = 1 << 20                  # below this, fused XLA elementwise already wins


def _activation_fn(y, activation):
    if activation == "relu":
        return jnp.maximum(y, 0)
    if activation == "leaky_relu":
        return jnp.where(y >= 0, y, jnp.asarray(0.01, y.dtype) * y)
    if activation == "selu":
        alpha = jnp.asarray(1.6732632423543772, y.dtype)
        scale = jnp.asarray(1.0507009873554805, y.dtype)
        return scale * jnp.where(y > 0, y, alpha * jnp.expm1(y))
    return y  # "none"


def _make_residual_kernel(activation):
    """Elementwise kernel: out = activation(x + x)."""

    def kernel(x_ref, o_ref):
        x = x_ref[...]
        y = x + x  # blocks = Identity, shortcut = Identity  =>  x + residual = 2x
        o_ref[...] = _activation_fn(y, activation).astype(o_ref.dtype)

    return kernel


def _per_buffer_tile_bytes():
    """VMEM budget per tile buffer; input+output double-buffered => ~4x this resident."""
    try:
        kind = jax.devices()[0].device_kind.lower()
    except Exception:
        kind = ""
    if "v5" in kind:
        return 2 * 1024 * 1024   # ~8 MiB total: safely under v5e's 16 MiB scoped-VMEM default
    return 4 * 1024 * 1024       # v6e/v7x: ~16 MiB total, under the 32 MiB scoped-VMEM default


def residual_block_forward(x, in_channels, out_channels, activation="relu", *,
                           min_pallas_elements=_MIN_PALLAS_ELEMENTS,
                           tile_bytes=None, donate_input=False):
    """Pallas implementation of ResidualBlock.forward for NCHW input `x`."""
    if activation not in _SUPPORTED_ACTIVATIONS:
        raise ValueError(f"unsupported activation: {activation}")
    assert x.shape[1] == in_channels, "channel dim mismatch"
    # NOTE: blocks and shortcut are both nn.Identity regardless of should_apply_shortcut,
    # so forward == activation(x + x) whether or not in_channels == out_channels.
    # TODO(synk): if non-identity blocks/shortcut are ever added, this kernel must change.

    orig_shape = x.shape
    dtype = x.dtype
    total = math.prod(orig_shape)
    itemsize = jnp.dtype(dtype).itemsize

    # Largest lane-dense width that divides the element count (free reshape, no padding).
    lane = next((l for l in _LANE_CANDIDATES if total % l == 0), None)

    # Fallback: tiny tensors (launch/reshape overhead dominates) or totals that don't divide
    # 128 lanes (host-side pad/slice would add 2 extra HBM round trips to a mem-bound op).
    if lane is None or total < min_pallas_elements:
        return _activation_fn(x + x, activation)

    rows = total // lane
    x2d = x.reshape(rows, lane)  # zero-copy repack: lane-dense, unmasked vector stores

    bytes_per_row = lane * itemsize
    budget = tile_bytes if tile_bytes is not None else _per_buffer_tile_bytes()
    if rows * bytes_per_row <= budget:
        tm = rows                                       # whole array in one block
    else:
        tm = max(8, (budget // bytes_per_row) // 8 * 8)  # multiple of 8 sublanes
    grid = (pl.cdiv(rows, tm),)                          # partial last block masked by Pallas

    cost = pl.CostEstimate(
        flops=2 * total,
        transcendentals=total if activation == "selu" else 0,
        bytes_accessed=2 * total * itemsize,
    )

    out2d = pl.pallas_call(
        _make_residual_kernel(activation),
        out_shape=jax.ShapeDtypeStruct(x2d.shape, dtype),
        grid_spec=pltpu.PrefetchScalarGridSpec(
            num_scalar_prefetch=0,
            grid=grid,
            in_specs=[pl.BlockSpec((tm, lane), lambda i: (i, 0))],
            out_specs=pl.BlockSpec((tm, lane), lambda i: (i, 0)),
        ),
        compiler_params=pltpu.CompilerParams(
            dimension_semantics=("parallel",),  # no carry -> v7x may shard across its 2 TCs
        ),
        cost_estimate=cost,
        # Only alias when the caller has truly given up x (otherwise XLA inserts a copy).
        input_output_aliases=({0: 0} if donate_input else {}),
    )(x2d)

    return out2d.reshape(orig_shape)


if __name__ == "__main__":
    # Module has no learnable parameters (Identity blocks/shortcut).
    in_channels, out_channels = 4, 4
    key = jax.random.PRNGKey(0)

    def ref(x, activation):
        return _activation_fn(x + x, activation)

    # Demo shape from the module: NCHW (2, 4, 16, 16).
    x = jax.random.normal(key, (2, in_channels, 16, 16), dtype=jnp.float32)

    # 1) Default path: tiny tensor -> jnp fast path (avoids custom-call overhead).
    out = jax.block_until_ready(residual_block_forward(x, in_channels, out_channels, "relu"))
    assert out.shape == x.shape and out.dtype == x.dtype
    assert jnp.allclose(out, ref(x, "relu"), atol=1e-6), "mismatch (fast path, relu)"

    # 2) Force the Pallas path on the same input, all activations (single full-array block).
    for act in _SUPPORTED_ACTIVATIONS:
        out_p = jax.block_until_ready(
            residual_block_forward(x, in_channels, out_channels, act,
                                   min_pallas_elements=0))
        assert jnp.allclose(out_p, ref(x, act), atol=1e-5, rtol=1e-5), f"mismatch ({act})"

    # 3) Multi-step grid with a partial final block (total=12800 -> lane=512, rows=25, tm=8).
    x2 = jax.random.normal(jax.random.PRNGKey(1), (2, in_channels, 40, 40), dtype=jnp.float32)
    out2 = jax.block_until_ready(
        residual_block_forward(x2, in_channels, out_channels, "leaky_relu",
                               min_pallas_elements=0, tile_bytes=16 * 1024))
    assert jnp.allclose(out2, ref(x2, "leaky_relu"), atol=1e-6), "mismatch (partial block)"

    # 4) Total not divisible by 128 -> clean jnp fallback (no host-side pad/slice round trips).
    x3 = jax.random.normal(jax.random.PRNGKey(2), (3, 5, 7, 11), dtype=jnp.float32)
    out3 = jax.block_until_ready(
        residual_block_forward(x3, 5, 5, "selu", min_pallas_elements=0))
    assert jnp.allclose(out3, ref(x3, "selu"), atol=1e-5, rtol=1e-5), "mismatch (fallback)"

    print("KERNEL_OK")
</pallas_src>

<mosaic_0001>
module attributes {stable_mosaic.version = 11 : i64} {
  func.func @kernel(%arg0: i32, %arg1: memref<1x2048xf32, #tpu.memory_space<vmem>>, %arg2: memref<1x2048xf32, #tpu.memory_space<vmem>>) attributes {dimension_semantics = [#tpu.dimension_semantics<parallel>], iteration_bounds = array<i64: 1>, scalar_prefetch = 0 : i64, scratch_operands = 0 : i64, tpu.core_type = #tpu.core_type<tc>, window_params = [{transform_indices = @transform_0, window_bounds = array<i64: 1, 2048>}, {transform_indices = @transform_1, window_bounds = array<i64: 1, 2048>}]} {
    %c0 = arith.constant 0 : index
    %c0_0 = arith.constant 0 : index
    %0 = vector.load %arg1[%c0, %c0_0] : memref<1x2048xf32, #tpu.memory_space<vmem>>, vector<1x2048xf32>
    %1 = arith.addf %0, %0 : vector<1x2048xf32>
    %cst = arith.constant 0.000000e+00 : f32
    %2 = vector.broadcast %cst : f32 to vector<1x2048xf32>
    %3 = arith.maximumf %1, %2 : vector<1x2048xf32>
    %c0_1 = arith.constant 0 : index
    %c0_2 = arith.constant 0 : index
    %4 = vector.load %arg2[%c0_1, %c0_2] : memref<1x2048xf32, #tpu.memory_space<vmem>>, vector<1x2048xf32>
    tpu.vector_store %arg2[%c0_1, %c0_2], %3 {strides = array<i32>} : memref<1x2048xf32, #tpu.memory_space<vmem>>, vector<1x2048xf32>,
    return
  }
  func.func @transform_0(%arg0: i32) -> (i32, i32) {
    %c0_i32 = arith.constant 0 : i32
    %c0_i32_0 = arith.constant 0 : i32
    return %arg0, %c0_i32 : i32, i32
  }
  func.func @transform_1(%arg0: i32) -> (i32, i32) {
    %c0_i32 = arith.constant 0 : i32
    %c0_i32_0 = arith.constant 0 : i32
    return %arg0, %c0_i32 : i32, i32
  }
}

</mosaic_0001>

<llo_original>
// kernel: tpu_custom_call.1
$region0: #{tpu_custom_call.1}
  #allocation0 [shape = 'u32[]', space=smem, size = 0x4, offset = 0x4, fixed_abs, tag = 'smem constant byte address 0x4 - core index']
  #allocation1 [shape = 'u32[144,128]{1,0:T(1,128)}', space=vmem, size = 0x12000, scoped, tag = 'internal scratch']
  %s0 = inlined_call_operand.hbm [shape: f32[1,2048], index: 0, kind: input, shape index: {}]
  %s1 = inlined_call_operand.hbm [shape: f32[1,2048], index: 1, kind: output, shape index: {}]
  %s2 = sld [smem:[#allocation0]]
  $region18: #{tpu_custom_call.1} parent=0
    _
  %s4 = ssub.s32 1, %s2
  %s5 = scalar_select 0, %s4, %s2
  $region1: #{tpu_custom_call.1} parent=0
    #allocation2 [shape = 'u8[8192]{0}', space=vmem, size = 0x2000, scoped, tag = 'input window, operand 0, single buffered']
    #allocation3 [shape = 's32[1]{0}', space=sflag, size = 0x4, scoped, tag = 'scoped memory for tpu_custom_call.1']
    #allocation4 [shape = 's32[1]{0}', space=sflag, size = 0x4, scoped, tag = 'scoped memory for tpu_custom_call.1']
    #allocation5 [shape = 'u8[8192]{0}', space=vmem, size = 0x2000, scoped, tag = 'output window, operand 0, single buffered']
    %6 = vsyncpa [#allocation3], 0
    %7 = vsyncpa [#allocation4], 0
    // Predicated region
    $region2: #{tpu_custom_call.1} parent=1 // pred_check
      _
    $region3: #{tpu_custom_call.1} parent=1 // pred_check_branch
      %9 = sbr.rel (0) target = $region5
    $region4: #{tpu_custom_call.1} parent=1 // pred_region
      %s11 = ssub.s32 256, 256
      %12 = vsyncadd [#allocation3], %s11
      %s14 = sshll.u32 [#allocation2], 4
      %s15 = int_to_ptr.vmem [resolvable:$true] %s14
      %17 = dma.hbm_to_vmem [thread:$0]  %s0, 256, %s15, [#allocation3]
    $region5: #{tpu_custom_call.1} parent=1 // pred_fallthru
      _
    // Predicated region
    $region6: #{tpu_custom_call.1} parent=1 // pred_check
      _
    $region7: #{tpu_custom_call.1} parent=1 // pred_check_branch
      %19 = sbr.rel (0) target = $region9
    $region8: #{tpu_custom_call.1} parent=1 // pred_region
      %20 = dma.done [#allocation3], 256
    $region9: #{tpu_custom_call.1} parent=1 // pred_fallthru
      _
    %v21 = vld [vmem:[#allocation2] sm:$0xff]
    %v22 = vld [vmem:[#allocation2 + $0x8] sm:$0xff]
    %v23 = vadd.f32 %v21, %v21
    %v24 = vadd.f32 %v22, %v22
    %v25 = vmax.f32 %v23, 0.0
    %v26 = vmax.f32 %v24, 0.0
    %27 = vst [vmem:[#allocation5] sm:$0xff] %v25
    %28 = vst [vmem:[#allocation5 + $0x8] sm:$0xff] %v26
    // Predicated region
    $region10: #{tpu_custom_call.1} parent=1 // pred_check
      _
    $region11: #{tpu_custom_call.1} parent=1 // pred_check_branch
      %30 = sbr.rel (0) target = $region13
    $region12: #{tpu_custom_call.1} parent=1 // pred_region
      %s32 = ssub.s32 256, 256
      %33 = vsyncadd [#allocation4], %s32
      %s35 = sshll.u32 [#allocation5], 4
      %s36 = int_to_ptr.vmem [resolvable:$true] %s35
      %38 = dma.vmem_to_hbm [thread:$0]  %s36, 256, %s1, [#allocation4]
    $region13: #{tpu_custom_call.1} parent=1 // pred_fallthru
      _
    // Predicated region
    $region14: #{tpu_custom_call.1} parent=1 // pred_check
      _
    $region15: #{tpu_custom_call.1} parent=1 // pred_check_branch
      %40 = sbr.rel (0) target = $region17
    $region16: #{tpu_custom_call.1} parent=1 // pred_region
      %41 = dma.done [#allocation4], 256
    $region17: #{tpu_custom_call.1} parent=1 // pred_fallthru
      _
    %42 = vsyncpa [#allocation3], 1
    %43 = vsyncpa [#allocation4], 1

</llo_original>
